<compile_context>
chip_gen: v7x
topology: tpu7x:2x2x1
jax: 0.10.0
libtpu: 0.0.40
codegen_flags: <defaults>
</compile_context>

<pallas_src>
import functools

import jax
import jax.numpy as jnp
from jax.experimental import pallas as pl
from jax.experimental.pallas import tpu as pltpu

LANE = 128
SUBLANE = 8
MAX_BLOCK_ROWS = 2048  # (2048, 128) f32 block = 1 MiB per input stream


def _kd_loss_kernel(x_ref, ycm_ref, ycp_ref, out_ref, *,
                    alpha, beta, block_rows, row_limit, col_limit, need_mask):
    x = x_ref[...].astype(jnp.float32)
    ycm = ycm_ref[...].astype(jnp.float32)
    ycp = ycp_ref[...].astype(jnp.float32)

    # stable softplus piece shared by both losses: max(x,0) + log1p(exp(-|x|))
    sp = jnp.maximum(x, 0.0) + jnp.log1p(jnp.exp(-jnp.abs(x)))

    # fused weighted per-element loss:
    #   alpha*(sp - x*ycm) + beta*(sp - x*ycp)
    elem = (alpha + beta) * sp - x * (alpha * ycm + beta * ycp)

    if need_mask:
        # Mask out lane-padding and the garbage rows of an overhanging last
        # block, using the *global* row/column of each element (static limits
        # baked in at trace time). jnp.where (select) so NaN/Inf garbage in
        # the unspecified padded region cannot leak into the sum.
        i = pl.program_id(0)
        r = jax.lax.broadcasted_iota(jnp.int32, elem.shape, 0)
        c = jax.lax.broadcasted_iota(jnp.int32, elem.shape, 1)
        grow = i * block_rows + r
        valid = (grow < row_limit) | ((grow == row_limit) & (c < col_limit))
        elem = jnp.where(valid, elem, 0.0)

    # Reduce the block to one (8, 128) partial with pure VPU adds (no XLU,
    # no masked scalar store); the cheap cross-lane reduce happens in XLA.
    partial = jnp.sum(elem.reshape(block_rows // SUBLANE, SUBLANE, LANE),
                      axis=0)
    out_ref[...] = partial[None]


def _as_lane_rows(a, rows):
    """Flatten to (rows, LANE); pads only when n is not a multiple of LANE."""
    flat = a.reshape(-1)
    pad = rows * LANE - flat.shape[0]
    if pad:
        flat = jnp.pad(flat, (0, pad))
    return flat.reshape(rows, LANE)


@functools.partial(jax.jit, static_argnames=("alpha", "beta"))
def kd_loss(y_pred_logits, y_cp_true, y_cm_true, alpha=1.0, beta=0.5):
    n = y_pred_logits.size
    rows = pl.cdiv(n, LANE)

    # Biggest block that fits the data, rounded to a sublane multiple, capped
    # at MAX_BLOCK_ROWS so 3 streams x 2 buffers stay well inside scoped VMEM
    # on every generation (including v7x's 32 MiB default).
    block_rows = min(MAX_BLOCK_ROWS, pl.cdiv(rows, SUBLANE) * SUBLANE)
    num_blocks = pl.cdiv(rows, block_rows)
    need_mask = (num_blocks * block_rows * LANE) != n

    logits2d = _as_lane_rows(y_pred_logits, rows)
    ycm2d = _as_lane_rows(y_cm_true, rows)
    ycp2d = _as_lane_rows(y_cp_true, rows)

    kernel = functools.partial(
        _kd_loss_kernel,
        alpha=float(alpha),
        beta=float(beta),
        block_rows=block_rows,
        row_limit=n // LANE,
        col_limit=n % LANE,
        need_mask=need_mask,
    )

    in_spec = pl.BlockSpec((block_rows, LANE), lambda i: (i, 0))
    out_spec = pl.BlockSpec((1, SUBLANE, LANE), lambda i: (i, 0, 0))

    partials = pl.pallas_call(
        kernel,
        out_shape=jax.ShapeDtypeStruct((num_blocks, SUBLANE, LANE),
                                       jnp.float32),
        grid_spec=pltpu.PrefetchScalarGridSpec(
            num_scalar_prefetch=0,
            grid=(num_blocks,),
            in_specs=[in_spec, in_spec, in_spec],
            out_specs=out_spec,
        ),
        compiler_params=pltpu.CompilerParams(
            dimension_semantics=("parallel",),
        ),
    )(logits2d, ycm2d, ycp2d)

    # Final tiny reduction + mean scaling (alpha/beta already folded in).
    return jnp.sum(partials) * (1.0 / float(n))


def _reference_kd_loss(logits, ycp, ycm, alpha=1.0, beta=0.5):
    def bce(x, y):
        l = jnp.maximum(x, 0.0) - x * y + jnp.log1p(jnp.exp(-jnp.abs(x)))
        return jnp.mean(l)

    return alpha * bce(logits, ycm) + beta * bce(logits, ycp)


if __name__ == "__main__":
    key = jax.random.PRNGKey(0)
    k1, k2, k3 = jax.random.split(key, 3)

    B, C, H, W = 2, 4, 16, 16  # NCHW, as the PyTorch module would see
    y_pred_logits = jax.random.normal(k1, (B, C, H, W), dtype=jnp.float32)
    # targets in [0, 1] as required by binary_cross_entropy_with_logits
    y_cp_true = jax.random.uniform(k2, (B, C, H, W), dtype=jnp.float32)
    y_cm_true = jax.nn.sigmoid(jax.random.normal(k3, (B, C, H, W)))

    loss = kd_loss(y_pred_logits, y_cp_true, y_cm_true, alpha=1.0, beta=0.5)
    loss = jax.block_until_ready(loss)

    ref = _reference_kd_loss(y_pred_logits, y_cp_true, y_cm_true)
    assert jnp.allclose(loss, ref, rtol=1e-5, atol=1e-5), (loss, ref)

    # Also exercise a ragged size (n not a multiple of the block, nor of 128)
    # to validate the in-kernel tail mask.
    m = 5 * 17 * 13  # 1105 elements
    xr = jax.random.normal(k1, (m,), dtype=jnp.float32)
    tr1 = jax.random.uniform(k2, (m,), dtype=jnp.float32)
    tr2 = jax.nn.sigmoid(jax.random.normal(k3, (m,)))
    lr = jax.block_until_ready(kd_loss(xr, tr1, tr2, alpha=1.0, beta=0.5))
    rr = _reference_kd_loss(xr, tr1, tr2)
    assert jnp.allclose(lr, rr, rtol=1e-5, atol=1e-5), (lr, rr)

    print("KERNEL_OK")
</pallas_src>

<mosaic_0001>
module attributes {stable_mosaic.version = 11 : i64} {
  func.func @_kd_loss_kernel(%arg0: i32, %arg1: memref<16x128xf32, #tpu.memory_space<vmem>>, %arg2: memref<16x128xf32, #tpu.memory_space<vmem>>, %arg3: memref<16x128xf32, #tpu.memory_space<vmem>>, %arg4: memref<1x8x128xf32, #tpu.memory_space<vmem>>) attributes {dimension_semantics = [#tpu.dimension_semantics<parallel>], iteration_bounds = array<i64: 1>, scalar_prefetch = 0 : i64, scratch_operands = 0 : i64, tpu.core_type = #tpu.core_type<tc>, window_params = [{transform_indices = @transform_0, window_bounds = array<i64: 16, 128>}, {transform_indices = @transform_1, window_bounds = array<i64: 16, 128>}, {transform_indices = @transform_2, window_bounds = array<i64: 16, 128>}, {transform_indices = @transform_3, window_bounds = array<i64: 1, 8, 128>}]} {
    %c0 = arith.constant 0 : index
    %c0_0 = arith.constant 0 : index
    %0 = vector.load %arg1[%c0, %c0_0] : memref<16x128xf32, #tpu.memory_space<vmem>>, vector<16x128xf32>
    %c0_1 = arith.constant 0 : index
    %c0_2 = arith.constant 0 : index
    %1 = vector.load %arg2[%c0_1, %c0_2] : memref<16x128xf32, #tpu.memory_space<vmem>>, vector<16x128xf32>
    %c0_3 = arith.constant 0 : index
    %c0_4 = arith.constant 0 : index
    %2 = vector.load %arg3[%c0_3, %c0_4] : memref<16x128xf32, #tpu.memory_space<vmem>>, vector<16x128xf32>
    %cst = arith.constant 0.000000e+00 : f32
    %3 = vector.broadcast %cst : f32 to vector<16x128xf32>
    %4 = arith.maximumf %0, %3 : vector<16x128xf32>
    %5 = math.absf %0 : vector<16x128xf32>
    %cst_5 = arith.constant 0.000000e+00 : f32
    %6 = vector.broadcast %cst_5 : f32 to vector<16x128xf32>
    %7 = arith.subf %6, %5 : vector<16x128xf32>
    %8 = math.exp %7 : vector<16x128xf32>
    %9 = math.log1p %8 : vector<16x128xf32>
    %10 = arith.addf %4, %9 : vector<16x128xf32>
    %cst_6 = arith.constant 1.500000e+00 : f32
    %11 = vector.broadcast %cst_6 : f32 to vector<16x128xf32>
    %12 = arith.mulf %11, %10 : vector<16x128xf32>
    %cst_7 = arith.constant 1.000000e+00 : f32
    %13 = vector.broadcast %cst_7 : f32 to vector<16x128xf32>
    %14 = arith.mulf %13, %1 : vector<16x128xf32>
    %cst_8 = arith.constant 5.000000e-01 : f32
    %15 = vector.broadcast %cst_8 : f32 to vector<16x128xf32>
    %16 = arith.mulf %15, %2 : vector<16x128xf32>
    %17 = arith.addf %14, %16 : vector<16x128xf32>
    %18 = arith.mulf %0, %17 : vector<16x128xf32>
    %19 = arith.subf %12, %18 : vector<16x128xf32>
    %20 = vector.shape_cast %19 : vector<16x128xf32> to vector<2x8x128xf32>
    %cst_9 = arith.constant dense<0.000000e+00> : vector<8x128xf32>
    %21 = vector.multi_reduction <add>, %20, %cst_9 [0] : vector<2x8x128xf32> to vector<8x128xf32>
    %22 = vector.shape_cast %21 : vector<8x128xf32> to vector<1x8x128xf32>
    %c0_10 = arith.constant 0 : index
    %c0_11 = arith.constant 0 : index
    %c0_12 = arith.constant 0 : index
    %23 = vector.load %arg4[%c0_10, %c0_11, %c0_12] : memref<1x8x128xf32, #tpu.memory_space<vmem>>, vector<1x8x128xf32>
    tpu.vector_store %arg4[%c0_10, %c0_11, %c0_12], %22 {strides = array<i32>} : memref<1x8x128xf32, #tpu.memory_space<vmem>>, vector<1x8x128xf32>,
    return
  }
  func.func @transform_0(%arg0: i32) -> (i32, i32) {
    %c0_i32 = arith.constant 0 : i32
    %c0_i32_0 = arith.constant 0 : i32
    return %arg0, %c0_i32 : i32, i32
  }
  func.func @transform_1(%arg0: i32) -> (i32, i32) {
    %c0_i32 = arith.constant 0 : i32
    %c0_i32_0 = arith.constant 0 : i32
    return %arg0, %c0_i32 : i32, i32
  }
  func.func @transform_2(%arg0: i32) -> (i32, i32) {
    %c0_i32 = arith.constant 0 : i32
    %c0_i32_0 = arith.constant 0 : i32
    return %arg0, %c0_i32 : i32, i32
  }
  func.func @transform_3(%arg0: i32) -> (i32, i32, i32) {
    %c0_i32 = arith.constant 0 : i32
    %c0_i32_0 = arith.constant 0 : i32
    %c0_i32_1 = arith.constant 0 : i32
    return %arg0, %c0_i32, %c0_i32_0 : i32, i32, i32
  }
}

</mosaic_0001>

<llo_original>
// kernel: kd_loss.1
$region0: #{kd_loss.1}
  #allocation0 [shape = 'u32[]', space=smem, size = 0x4, offset = 0x4, fixed_abs, tag = 'smem constant byte address 0x4 - core index']
  #allocation1 [shape = 'u32[144,128]{1,0:T(1,128)}', space=vmem, size = 0x12000, scoped, tag = 'internal scratch']
  %s0 = inlined_call_operand.vmem [shape: f32[16,128], index: 0, kind: input, shape index: {}]
  %s1 = inlined_call_operand.vmem [shape: f32[16,128], index: 1, kind: input, shape index: {}]
  %s2 = inlined_call_operand.vmem [shape: f32[16,128], index: 2, kind: input, shape index: {}]
  %s3 = inlined_call_operand.vmem [shape: f32[1,8,128], index: 3, kind: output, shape index: {}]
  %s4 = sld [smem:[#allocation0]]
  $region22: #{kd_loss.1} parent=0
    _
  %s6 = ssub.s32 1, %s4
  %s7 = scalar_select 0, %s6, %s4
  // Predicated region
  $region2: #{kd_loss.1} parent=0 // pred_check
    _
  $region3: #{kd_loss.1} parent=0 // pred_check_branch
    %9 = sbr.rel (0) target = $region5
  $region4: #{kd_loss.1} parent=0 // pred_region
    _
  $region5: #{kd_loss.1} parent=0 // pred_fallthru
    _
  // Predicated region
  $region6: #{kd_loss.1} parent=0 // pred_check
    _
  $region7: #{kd_loss.1} parent=0 // pred_check_branch
    %11 = sbr.rel (0) target = $region9
  $region8: #{kd_loss.1} parent=0 // pred_region
    _
  $region9: #{kd_loss.1} parent=0 // pred_fallthru
    _
  // Predicated region
  $region10: #{kd_loss.1} parent=0 // pred_check
    _
  $region11: #{kd_loss.1} parent=0 // pred_check_branch
    %13 = sbr.rel (0) target = $region13
  $region12: #{kd_loss.1} parent=0 // pred_region
    _
  $region13: #{kd_loss.1} parent=0 // pred_fallthru
    _
  %v14 = vld [vmem:[%s0] sm:$0xff]
  %v15 = vld [vmem:[%s0 + $0x8] sm:$0xff]
  %v16 = vld [vmem:[%s1] sm:$0xff]
  %v17 = vld [vmem:[%s1 + $0x8] sm:$0xff]
  %v18 = vld [vmem:[%s2] sm:$0xff]
  %v19 = vld [vmem:[%s2 + $0x8] sm:$0xff]
  %v20 = vmax.f32 %v14, 0.0
  %v21 = vmax.f32 %v15, 0.0
  %v22 = vand.u32 2147483647, %v14
  %v23 = vand.u32 2147483647, %v15
  %v24 = vsub.f32 0.0, %v22
  %v25 = vsub.f32 0.0, %v23
  %v26 = vmul.f32 %v24, 1.442695
  %v27 = vpow.pop %v26
  %v28 = vmul.f32 %v25, 1.442695
  %v29 = vpow.pop %v28
  %v30 = vadd.f32 %v27, 1.0
  %v31 = vlog2.pop %v30
  %v32 = vmul.f32 %v31, 0.6931472
  %v33 = vmul.f32 -0.5, %v27
  %v34 = vadd.f32 %v33, 1.0
  %v35 = vmul.f32 %v34, %v27
  %v36 = vand.u32 2147483647, %v27
  %vm37 = vcmp.lt.f32.partialorder %v36, 0.0004427343
  %v38 = vsel %vm37, %v35, %v32
  %v39 = vadd.f32 %v29, 1.0
  %v40 = vlog2.pop %v39
  %v41 = vmul.f32 %v40, 0.6931472
  %v42 = vmul.f32 -0.5, %v29
  %v43 = vadd.f32 %v42, 1.0
  %v44 = vmul.f32 %v43, %v29
  %v45 = vand.u32 2147483647, %v29
  %vm46 = vcmp.lt.f32.partialorder %v45, 0.0004427343
  %v47 = vsel %vm46, %v44, %v41
  %v48 = vadd.f32 %v20, %v38
  %v49 = vadd.f32 %v21, %v47
  %v50 = vmul.f32 %v48, 1.5
  %v51 = vmul.f32 %v49, 1.5
  %v52 = vmul.f32 %v18, 0.5
  %v53 = vmul.f32 %v19, 0.5
  %v54 = vadd.f32 %v16, %v52
  %v55 = vadd.f32 %v17, %v53
  %v56 = vmul.f32 %v14, %v54
  %v57 = vmul.f32 %v15, %v55
  %v58 = vsub.f32 %v50, %v56
  %v59 = vsub.f32 %v51, %v57
  %v60 = vadd.f32 %v58, %v59
  %61 = vst [vmem:[%s3] sm:$0xff] %v60
  // Predicated region
  $region14: #{kd_loss.1} parent=0 // pred_check
    _
  $region15: #{kd_loss.1} parent=0 // pred_check_branch
    %63 = sbr.rel (0) target = $region17
  $region16: #{kd_loss.1} parent=0 // pred_region
    _
  $region17: #{kd_loss.1} parent=0 // pred_fallthru
    _
  // Predicated region
  $region18: #{kd_loss.1} parent=0 // pred_check
    _
  $region19: #{kd_loss.1} parent=0 // pred_check_branch
    %65 = sbr.rel (0) target = $region21
  $region20: #{kd_loss.1} parent=0 // pred_region
    _
  $region21: #{kd_loss.1} parent=0 // pred_fallthru
    _

</llo_original>
